<compile_context>
chip_gen: v6e
topology: v6e:2x2x1
jax: 0.10.0
libtpu: 0.0.40
codegen_flags: <defaults>
</compile_context>

<pallas_src>
import math

import jax
import jax.numpy as jnp
from jax.experimental import pallas as pl
from jax.experimental.pallas import tpu as pltpu


def _round_up(x, m):
    return (x + m - 1) // m * m


def _rnn_layer_kernel(x_ref, wx_ref, wh_ref, b_ref, h0_ref, out_ref, h_scratch):
    """One (batch-tile, time-block) grid step.

    x_ref/out_ref : (1, T_BLK*TB, Dp)  time-major rows (row = t*TB + local_b), bf16
    wx_ref/wh_ref : (Dp, Dp)           input->hidden / hidden->hidden weights, bf16
    b_ref, h0_ref : (1, Dp)            f32 bias / initial hidden state
    h_scratch     : (TB, Dp)           f32 hidden state carried across time blocks
    """
    tb, dp = h_scratch.shape
    t_blk = x_ref.shape[1] // tb

    # (Re)initialize the carried hidden state at the start of every batch tile.
    @pl.when(pl.program_id(1) == 0)
    def _():
        h_scratch[...] = jnp.broadcast_to(h0_ref[...], (tb, dp))

    # Hoisted non-recurrent matmul for the whole time block: one big bf16 MXU
    # matmul (M = T_BLK*TB rows) with f32 accumulation, plus the bias.
    xw = (
        jnp.dot(x_ref[0], wx_ref[...], preferred_element_type=jnp.float32)
        + b_ref[...]
    )  # (T_BLK*TB, Dp) f32

    wh = wh_ref[...]
    h = h_scratch[...]  # f32
    for t in range(t_blk):  # short, fully-unrolled serial recurrence
        hh = jnp.dot(h.astype(wh.dtype), wh, preferred_element_type=jnp.float32)
        h = jnp.tanh(xw[t * tb:(t + 1) * tb, :] + hh)
        out_ref[0, t * tb:(t + 1) * tb, :] = h.astype(out_ref.dtype)

    h_scratch[...] = h  # carry into the next time block


def rnn_layer_forward(x, wx, wh, b, h0, *, t_blk, tb, vmem_limit_bytes=None):
    """Run one RNNLayer.

    x: (n_b, Lp*tb, Dp) — per batch tile, rows are time-major flattened.
    Returns the same shape/dtype (feeds the next layer directly).
    """
    n_b, rows, dp = x.shape
    n_t = rows // (t_blk * tb)

    cp = dict(dimension_semantics=("parallel", "arbitrary"))
    if vmem_limit_bytes is not None:  # raise for large D (esp. v7x 64 MiB / v5e 16 MiB scoped)
        cp["vmem_limit_bytes"] = vmem_limit_bytes

    return pl.pallas_call(
        _rnn_layer_kernel,
        out_shape=jax.ShapeDtypeStruct(x.shape, x.dtype),
        grid_spec=pltpu.PrefetchScalarGridSpec(
            num_scalar_prefetch=0,
            grid=(n_b, n_t),
            in_specs=[
                pl.BlockSpec((1, t_blk * tb, dp), lambda i, j: (i, j, 0)),  # x block
                pl.BlockSpec((dp, dp), lambda i, j: (0, 0)),                # Wx (resident)
                pl.BlockSpec((dp, dp), lambda i, j: (0, 0)),                # Wh (resident)
                pl.BlockSpec((1, dp), lambda i, j: (0, 0)),                 # bias (f32)
                pl.BlockSpec((1, dp), lambda i, j: (0, 0)),                 # h0   (f32)
            ],
            out_specs=pl.BlockSpec((1, t_blk * tb, dp), lambda i, j: (i, j, 0)),
            scratch_shapes=[pltpu.VMEM((tb, dp), jnp.float32)],             # carried hidden
        ),
        compiler_params=pltpu.CompilerParams(**cp),
    )(x, wx, wh, b, h0)


def init_rnn_params(key, d_model, n_layers, dtype=jnp.float32):
    """Deterministic init matching nn.Linear(2*D, D) default (uniform +-1/sqrt(fan_in))."""
    params = []
    bound = 1.0 / math.sqrt(2 * d_model)
    for i in range(n_layers):
        kw, kb = jax.random.split(jax.random.fold_in(key, i))
        w = jax.random.uniform(kw, (d_model, 2 * d_model), dtype, -bound, bound)  # (out, in)
        b = jax.random.uniform(kb, (d_model,), dtype, -bound, bound)
        h0 = jnp.zeros((1, d_model), dtype)  # nn.Parameter(torch.zeros(1, d_model))
        params.append({"w": w, "b": b, "h0": h0})
    return params


def rnn_forward(x_bld, params, stop_at_layer=None, *, time_block=16,
                batch_block=None, compute_dtype=jnp.bfloat16,
                vmem_limit_bytes=None):
    """Full RNN.forward. x_bld: (B, L, D) as in PyTorch. Returns (B, L, D)."""
    # TODO(synk): in_dropout (p=0.1) is identity in eval mode; training-mode dropout not modeled.
    B, L, D = x_bld.shape
    dp = _round_up(D, 128)           # lane-dense last dim
    bp = _round_up(B, 8)             # sublane-aligned batch
    t_blk = min(time_block, L)
    lp = _round_up(L, t_blk)
    tb = bp if batch_block is None else min(_round_up(batch_block, 8), bp)
    if bp % tb != 0:
        tb = bp
    n_b = bp // tb

    # (B, L, D) -> padded, time-major, flattened per batch tile: (n_b, Lp*tb, Dp).
    # Zero padding is exact: padded weight rows/cols and bias/h0 lanes are zero,
    # so padded hidden lanes stay exactly 0 and never contaminate real lanes.
    x = jnp.transpose(x_bld, (1, 0, 2))                                   # (L, B, D)
    x = jnp.pad(x, ((0, lp - L), (0, bp - B), (0, dp - D)))               # (Lp, Bp, Dp)
    x = x.reshape(lp, n_b, tb, dp).transpose(1, 0, 2, 3).reshape(n_b, lp * tb, dp)
    x = x.astype(compute_dtype)

    for idx, p in enumerate(params):
        w = p["w"]  # (D, 2D): [:, :D] acts on x_t, [:, D:] acts on h_{t-1}
        wx = jnp.zeros((dp, dp), compute_dtype).at[:D, :D].set(w[:, :D].T.astype(compute_dtype))
        wh = jnp.zeros((dp, dp), compute_dtype).at[:D, :D].set(w[:, D:].T.astype(compute_dtype))
        b = jnp.zeros((1, dp), jnp.float32).at[:, :D].set(p["b"].reshape(1, D).astype(jnp.float32))
        h0 = jnp.zeros((1, dp), jnp.float32).at[:, :D].set(p["h0"].reshape(1, D).astype(jnp.float32))
        x = rnn_layer_forward(x, wx, wh, b, h0, t_blk=t_blk, tb=tb,
                              vmem_limit_bytes=vmem_limit_bytes)
        if stop_at_layer == idx + 1:
            break

    # Undo the layout plumbing and padding.
    out = x.reshape(n_b, lp, tb, dp).transpose(1, 0, 2, 3).reshape(lp, bp, dp)
    out = out[:L, :B, :D]
    return jnp.transpose(out, (1, 0, 2)).astype(x_bld.dtype)


def _reference_forward_matched(x_bld, params, compute_dtype=jnp.bfloat16):
    """Pure-JAX reference with the same bf16-matmul / f32-accumulate discipline as the kernel."""
    B, L, D = x_bld.shape
    x = x_bld.astype(compute_dtype)
    for p in params:
        wx = p["w"][:, :D].T.astype(compute_dtype)
        wh = p["w"][:, D:].T.astype(compute_dtype)
        b = p["b"].astype(jnp.float32)
        h = jnp.broadcast_to(p["h0"].astype(jnp.float32), (B, D))
        outs = []
        for t in range(L):
            xw = jnp.dot(x[:, t, :], wx, preferred_element_type=jnp.float32) + b
            hh = jnp.dot(h.astype(compute_dtype), wh, preferred_element_type=jnp.float32)
            h = jnp.tanh(xw + hh)
            outs.append(h)
        x = jnp.stack(outs, axis=1).astype(compute_dtype)
    return x.astype(x_bld.dtype)


def _reference_forward_f32(x_bld, params):
    """Exact PyTorch semantics in pure f32 (documentation only; bf16 kernel
    diverges from this at the ~1e-2 level, as expected)."""
    B, L, D = x_bld.shape
    x = x_bld
    for p in params:
        h = jnp.broadcast_to(p["h0"], (B, D))
        outs = []
        for t in range(L):
            cat = jnp.concatenate([x[:, t, :], h], axis=1)
            h = jnp.tanh(cat @ p["w"].T + p["b"])
            outs.append(h)
        x = jnp.stack(outs, axis=1)
    return x


if __name__ == "__main__":
    B, L, D = 2, 8, 32
    n_layers = 2

    key = jax.random.PRNGKey(0)
    kx, kp = jax.random.split(key)
    x = jax.random.normal(kx, (B, L, D), jnp.float32)
    params = init_rnn_params(kp, D, n_layers)

    out = jax.jit(rnn_forward)(x, params)
    out = jax.block_until_ready(out)
    assert out.shape == (B, L, D), out.shape

    ref = _reference_forward_matched(x, params)
    max_err = float(jnp.max(jnp.abs(out - ref)))
    assert jnp.allclose(out, ref, atol=2e-2, rtol=2e-2), max_err

    print("KERNEL_OK")
</pallas_src>

<mosaic_0001>
module attributes {stable_mosaic.version = 11 : i64} {
  func.func @_rnn_layer_kernel(%arg0: i32, %arg1: i32, %arg2: memref<1x64x128xbf16, #tpu.memory_space<vmem>>, %arg3: memref<128x128xbf16, #tpu.memory_space<vmem>>, %arg4: memref<128x128xbf16, #tpu.memory_space<vmem>>, %arg5: memref<1x128xf32, #tpu.memory_space<vmem>>, %arg6: memref<1x128xf32, #tpu.memory_space<vmem>>, %arg7: memref<1x64x128xbf16, #tpu.memory_space<vmem>>, %arg8: memref<8x128xf32, #tpu.memory_space<vmem>>) attributes {dimension_semantics = [#tpu.dimension_semantics<parallel>, #tpu.dimension_semantics<arbitrary>], iteration_bounds = array<i64: 1, 1>, scalar_prefetch = 0 : i64, scratch_operands = 1 : i64, tpu.core_type = #tpu.core_type<tc>, window_params = [{transform_indices = @transform_0, window_bounds = array<i64: 1, 64, 128>}, {pipeline_mode = #tpu.pipeline_mode<synchronous>, transform_indices = @transform_1, window_bounds = array<i64: 128, 128>}, {pipeline_mode = #tpu.pipeline_mode<synchronous>, transform_indices = @transform_2, window_bounds = array<i64: 128, 128>}, {pipeline_mode = #tpu.pipeline_mode<synchronous>, transform_indices = @transform_3, window_bounds = array<i64: 1, 128>}, {pipeline_mode = #tpu.pipeline_mode<synchronous>, transform_indices = @transform_4, window_bounds = array<i64: 1, 128>}, {transform_indices = @transform_5, window_bounds = array<i64: 1, 64, 128>}]} {
    %c0_i32 = arith.constant 0 : i32
    %0 = arith.cmpi eq, %arg1, %c0_i32 : i32
    %1 = arith.extui %0 : i1 to i32
    %c0_i32_0 = arith.constant 0 : i32
    %2 = arith.cmpi ne, %1, %c0_i32_0 : i32
    scf.if %2 {
      %c0_38 = arith.constant 0 : index
      %c0_39 = arith.constant 0 : index
      %85 = vector.load %arg6[%c0_38, %c0_39] : memref<1x128xf32, #tpu.memory_space<vmem>>, vector<1x128xf32>
      %86 = vector.shape_cast %85 : vector<1x128xf32> to vector<1x128xf32>
      %87 = vector.broadcast %86 : vector<1x128xf32> to vector<8x128xf32>
      %c0_40 = arith.constant 0 : index
      %c0_41 = arith.constant 0 : index
      %88 = vector.load %arg8[%c0_40, %c0_41] : memref<8x128xf32, #tpu.memory_space<vmem>>, vector<8x128xf32>
      tpu.vector_store %arg8[%c0_40, %c0_41], %87 {strides = array<i32>} : memref<8x128xf32, #tpu.memory_space<vmem>>, vector<8x128xf32>,
    } else {
    }
    %c0 = arith.constant 0 : index
    %c0_1 = arith.constant 0 : index
    %c0_2 = arith.constant 0 : index
    %3 = vector.load %arg2[%c0, %c0_1, %c0_2] : memref<1x64x128xbf16, #tpu.memory_space<vmem>>, vector<1x64x128xbf16>
    %4 = vector.shape_cast %3 : vector<1x64x128xbf16> to vector<64x128xbf16>
    %c0_3 = arith.constant 0 : index
    %c0_4 = arith.constant 0 : index
    %5 = vector.load %arg3[%c0_3, %c0_4] : memref<128x128xbf16, #tpu.memory_space<vmem>>, vector<128x128xbf16>
    %cst = arith.constant dense<0.000000e+00> : vector<64x128xf32>
    %6 = tpu.matmul %4, %5, %cst {dimension_numbers = #tpu.dot_dimension_numbers<[1], [0], [0], [1], [0, 0, 1, 1], [], []>} : vector<64x128xbf16>, vector<128x128xbf16>, vector<64x128xf32> -> vector<64x128xf32>
    %c0_5 = arith.constant 0 : index
    %c0_6 = arith.constant 0 : index
    %7 = vector.load %arg5[%c0_5, %c0_6] : memref<1x128xf32, #tpu.memory_space<vmem>>, vector<1x128xf32>
    %8 = vector.broadcast %7 : vector<1x128xf32> to vector<64x128xf32>
    %9 = arith.addf %6, %8 : vector<64x128xf32>
    %c0_7 = arith.constant 0 : index
    %c0_8 = arith.constant 0 : index
    %10 = vector.load %arg4[%c0_7, %c0_8] : memref<128x128xbf16, #tpu.memory_space<vmem>>, vector<128x128xbf16>
    %c0_9 = arith.constant 0 : index
    %c0_10 = arith.constant 0 : index
    %11 = vector.load %arg8[%c0_9, %c0_10] : memref<8x128xf32, #tpu.memory_space<vmem>>, vector<8x128xf32>
    %12 = arith.truncf %11 : vector<8x128xf32> to vector<8x128xbf16>
    %cst_11 = arith.constant dense<0.000000e+00> : vector<8x128xf32>
    %13 = tpu.matmul %12, %10, %cst_11 {dimension_numbers = #tpu.dot_dimension_numbers<[1], [0], [0], [1], [0, 0, 1, 1], [], []>} : vector<8x128xbf16>, vector<128x128xbf16>, vector<8x128xf32> -> vector<8x128xf32>
    %14 = vector.extract_strided_slice %9 {offsets = [0, 0], sizes = [8, 128], strides = [1, 1]} : vector<64x128xf32> to vector<8x128xf32>
    %15 = arith.addf %14, %13 : vector<8x128xf32>
    %16 = math.tanh %15 : vector<8x128xf32>
    %17 = arith.truncf %16 : vector<8x128xf32> to vector<8x128xbf16>
    %c0_12 = arith.constant 0 : index
    %c0_13 = arith.constant 0 : index
    %c0_14 = arith.constant 0 : index
    %18 = vector.load %arg7[%c0_12, %c0_13, %c0_14] : memref<1x64x128xbf16, #tpu.memory_space<vmem>>, vector<1x8x128xbf16>
    %19 = vector.shape_cast %18 : vector<1x8x128xbf16> to vector<8x128xbf16>
    %20 = vector.shape_cast %17 : vector<8x128xbf16> to vector<1x8x128xbf16>
    tpu.vector_store %arg7[%c0_12, %c0_13, %c0_14], %20 {strides = array<i32>} : memref<1x64x128xbf16, #tpu.memory_space<vmem>>, vector<1x8x128xbf16>,
    %21 = arith.truncf %16 : vector<8x128xf32> to vector<8x128xbf16>
    %cst_15 = arith.constant dense<0.000000e+00> : vector<8x128xf32>
    %22 = tpu.matmul %21, %10, %cst_15 {dimension_numbers = #tpu.dot_dimension_numbers<[1], [0], [0], [1], [0, 0, 1, 1], [], []>} : vector<8x128xbf16>, vector<128x128xbf16>, vector<8x128xf32> -> vector<8x128xf32>
    %23 = vector.extract_strided_slice %9 {offsets = [8, 0], sizes = [8, 128], strides = [1, 1]} : vector<64x128xf32> to vector<8x128xf32>
    %24 = arith.addf %23, %22 : vector<8x128xf32>
    %25 = math.tanh %24 : vector<8x128xf32>
    %26 = arith.truncf %25 : vector<8x128xf32> to vector<8x128xbf16>
    %c0_16 = arith.constant 0 : index
    %c8 = arith.constant 8 : index
    %c0_17 = arith.constant 0 : index
    %27 = vector.load %arg7[%c0_16, %c8, %c0_17] : memref<1x64x128xbf16, #tpu.memory_space<vmem>>, vector<1x8x128xbf16>
    %28 = vector.shape_cast %27 : vector<1x8x128xbf16> to vector<8x128xbf16>
    %29 = vector.shape_cast %26 : vector<8x128xbf16> to vector<1x8x128xbf16>
    tpu.vector_store %arg7[%c0_16, %c8, %c0_17], %29 {strides = array<i32>} : memref<1x64x128xbf16, #tpu.memory_space<vmem>>, vector<1x8x128xbf16>,
    %30 = arith.truncf %25 : vector<8x128xf32> to vector<8x128xbf16>
    %cst_18 = arith.constant dense<0.000000e+00> : vector<8x128xf32>
    %31 = tpu.matmul %30, %10, %cst_18 {dimension_numbers = #tpu.dot_dimension_numbers<[1], [0], [0], [1], [0, 0, 1, 1], [], []>} : vector<8x128xbf16>, vector<128x128xbf16>, vector<8x128xf32> -> vector<8x128xf32>
    %32 = vector.extract_strided_slice %9 {offsets = [16, 0], sizes = [8, 128], strides = [1, 1]} : vector<64x128xf32> to vector<8x128xf32>
    %33 = arith.addf %32, %31 : vector<8x128xf32>
    %34 = math.tanh %33 : vector<8x128xf32>
    %35 = arith.truncf %34 : vector<8x128xf32> to vector<8x128xbf16>
    %c0_19 = arith.constant 0 : index
    %c16 = arith.constant 16 : index
    %c0_20 = arith.constant 0 : index
    %36 = vector.load %arg7[%c0_19, %c16, %c0_20] : memref<1x64x128xbf16, #tpu.memory_space<vmem>>, vector<1x8x128xbf16>
    %37 = vector.shape_cast %36 : vector<1x8x128xbf16> to vector<8x128xbf16>
    %38 = vector.shape_cast %35 : vector<8x128xbf16> to vector<1x8x128xbf16>
    tpu.vector_store %arg7[%c0_19, %c16, %c0_20], %38 {strides = array<i32>} : memref<1x64x128xbf16, #tpu.memory_space<vmem>>, vector<1x8x128xbf16>,
    %39 = arith.truncf %34 : vector<8x128xf32> to vector<8x128xbf16>
    %cst_21 = arith.constant dense<0.000000e+00> : vector<8x128xf32>
    %40 = tpu.matmul %39, %10, %cst_21 {dimension_numbers = #tpu.dot_dimension_numbers<[1], [0], [0], [1], [0, 0, 1, 1], [], []>} : vector<8x128xbf16>, vector<128x128xbf16>, vector<8x128xf32> -> vector<8x128xf32>
    %41 = vector.extract_strided_slice %9 {offsets = [24, 0], sizes = [8, 128], strides = [1, 1]} : vector<64x128xf32> to vector<8x128xf32>
    %42 = arith.addf %41, %40 : vector<8x128xf32>
    %43 = math.tanh %42 : vector<8x128xf32>
    %44 = arith.truncf %43 : vector<8x128xf32> to vector<8x128xbf16>
    %c0_22 = arith.constant 0 : index
    %c24 = arith.constant 24 : index
    %c0_23 = arith.constant 0 : index
    %45 = vector.load %arg7[%c0_22, %c24, %c0_23] : memref<1x64x128xbf16, #tpu.memory_space<vmem>>, vector<1x8x128xbf16>
    %46 = vector.shape_cast %45 : vector<1x8x128xbf16> to vector<8x128xbf16>
    %47 = vector.shape_cast %44 : vector<8x128xbf16> to vector<1x8x128xbf16>
    tpu.vector_store %arg7[%c0_22, %c24, %c0_23], %47 {strides = array<i32>} : memref<1x64x128xbf16, #tpu.memory_space<vmem>>, vector<1x8x128xbf16>,
    %48 = arith.truncf %43 : vector<8x128xf32> to vector<8x128xbf16>
    %cst_24 = arith.constant dense<0.000000e+00> : vector<8x128xf32>
    %49 = tpu.matmul %48, %10, %cst_24 {dimension_numbers = #tpu.dot_dimension_numbers<[1], [0], [0], [1], [0, 0, 1, 1], [], []>} : vector<8x128xbf16>, vector<128x128xbf16>, vector<8x128xf32> -> vector<8x128xf32>
    %50 = vector.extract_strided_slice %9 {offsets = [32, 0], sizes = [8, 128], strides = [1, 1]} : vector<64x128xf32> to vector<8x128xf32>
    %51 = arith.addf %50, %49 : vector<8x128xf32>
    %52 = math.tanh %51 : vector<8x128xf32>
    %53 = arith.truncf %52 : vector<8x128xf32> to vector<8x128xbf16>
    %c0_25 = arith.constant 0 : index
    %c32 = arith.constant 32 : index
    %c0_26 = arith.constant 0 : index
    %54 = vector.load %arg7[%c0_25, %c32, %c0_26] : memref<1x64x128xbf16, #tpu.memory_space<vmem>>, vector<1x8x128xbf16>
    %55 = vector.shape_cast %54 : vector<1x8x128xbf16> to vector<8x128xbf16>
    %56 = vector.shape_cast %53 : vector<8x128xbf16> to vector<1x8x128xbf16>
    tpu.vector_store %arg7[%c0_25, %c32, %c0_26], %56 {strides = array<i32>} : memref<1x64x128xbf16, #tpu.memory_space<vmem>>, vector<1x8x128xbf16>,
    %57 = arith.truncf %52 : vector<8x128xf32> to vector<8x128xbf16>
    %cst_27 = arith.constant dense<0.000000e+00> : vector<8x128xf32>
    %58 = tpu.matmul %57, %10, %cst_27 {dimension_numbers = #tpu.dot_dimension_numbers<[1], [0], [0], [1], [0, 0, 1, 1], [], []>} : vector<8x128xbf16>, vector<128x128xbf16>, vector<8x128xf32> -> vector<8x128xf32>
    %59 = vector.extract_strided_slice %9 {offsets = [40, 0], sizes = [8, 128], strides = [1, 1]} : vector<64x128xf32> to vector<8x128xf32>
    %60 = arith.addf %59, %58 : vector<8x128xf32>
    %61 = math.tanh %60 : vector<8x128xf32>
    %62 = arith.truncf %61 : vector<8x128xf32> to vector<8x128xbf16>
    %c0_28 = arith.constant 0 : index
    %c40 = arith.constant 40 : index
    %c0_29 = arith.constant 0 : index
    %63 = vector.load %arg7[%c0_28, %c40, %c0_29] : memref<1x64x128xbf16, #tpu.memory_space<vmem>>, vector<1x8x128xbf16>
    %64 = vector.shape_cast %63 : vector<1x8x128xbf16> to vector<8x128xbf16>
    %65 = vector.shape_cast %62 : vector<8x128xbf16> to vector<1x8x128xbf16>
    tpu.vector_store %arg7[%c0_28, %c40, %c0_29], %65 {strides = array<i32>} : memref<1x64x128xbf16, #tpu.memory_space<vmem>>, vector<1x8x128xbf16>,
    %66 = arith.truncf %61 : vector<8x128xf32> to vector<8x128xbf16>
    %cst_30 = arith.constant dense<0.000000e+00> : vector<8x128xf32>
    %67 = tpu.matmul %66, %10, %cst_30 {dimension_numbers = #tpu.dot_dimension_numbers<[1], [0], [0], [1], [0, 0, 1, 1], [], []>} : vector<8x128xbf16>, vector<128x128xbf16>, vector<8x128xf32> -> vector<8x128xf32>
    %68 = vector.extract_strided_slice %9 {offsets = [48, 0], sizes = [8, 128], strides = [1, 1]} : vector<64x128xf32> to vector<8x128xf32>
    %69 = arith.addf %68, %67 : vector<8x128xf32>
    %70 = math.tanh %69 : vector<8x128xf32>
    %71 = arith.truncf %70 : vector<8x128xf32> to vector<8x128xbf16>
    %c0_31 = arith.constant 0 : index
    %c48 = arith.constant 48 : index
    %c0_32 = arith.constant 0 : index
    %72 = vector.load %arg7[%c0_31, %c48, %c0_32] : memref<1x64x128xbf16, #tpu.memory_space<vmem>>, vector<1x8x128xbf16>
    %73 = vector.shape_cast %72 : vector<1x8x128xbf16> to vector<8x128xbf16>
    %74 = vector.shape_cast %71 : vector<8x128xbf16> to vector<1x8x128xbf16>
    tpu.vector_store %arg7[%c0_31, %c48, %c0_32], %74 {strides = array<i32>} : memref<1x64x128xbf16, #tpu.memory_space<vmem>>, vector<1x8x128xbf16>,
    %75 = arith.truncf %70 : vector<8x128xf32> to vector<8x128xbf16>
    %cst_33 = arith.constant dense<0.000000e+00> : vector<8x128xf32>
    %76 = tpu.matmul %75, %10, %cst_33 {dimension_numbers = #tpu.dot_dimension_numbers<[1], [0], [0], [1], [0, 0, 1, 1], [], []>} : vector<8x128xbf16>, vector<128x128xbf16>, vector<8x128xf32> -> vector<8x128xf32>
    %77 = vector.extract_strided_slice %9 {offsets = [56, 0], sizes = [8, 128], strides = [1, 1]} : vector<64x128xf32> to vector<8x128xf32>
    %78 = arith.addf %77, %76 : vector<8x128xf32>
    %79 = math.tanh %78 : vector<8x128xf32>
    %80 = arith.truncf %79 : vector<8x128xf32> to vector<8x128xbf16>
    %c0_34 = arith.constant 0 : index
    %c56 = arith.constant 56 : index
    %c0_35 = arith.constant 0 : index
    %81 = vector.load %arg7[%c0_34, %c56, %c0_35] : memref<1x64x128xbf16, #tpu.memory_space<vmem>>, vector<1x8x128xbf16>
    %82 = vector.shape_cast %81 : vector<1x8x128xbf16> to vector<8x128xbf16>
    %83 = vector.shape_cast %80 : vector<8x128xbf16> to vector<1x8x128xbf16>
    tpu.vector_store %arg7[%c0_34, %c56, %c0_35], %83 {strides = array<i32>} : memref<1x64x128xbf16, #tpu.memory_space<vmem>>, vector<1x8x128xbf16>,
    %c0_36 = arith.constant 0 : index
    %c0_37 = arith.constant 0 : index
    %84 = vector.load %arg8[%c0_36, %c0_37] : memref<8x128xf32, #tpu.memory_space<vmem>>, vector<8x128xf32>
    tpu.vector_store %arg8[%c0_36, %c0_37], %79 {strides = array<i32>} : memref<8x128xf32, #tpu.memory_space<vmem>>, vector<8x128xf32>,
    return
  }
  func.func @transform_0(%arg0: i32, %arg1: i32) -> (i32, i32, i32) {
    %c0_i32 = arith.constant 0 : i32
    %c0_i32_0 = arith.constant 0 : i32
    return %arg0, %arg1, %c0_i32 : i32, i32, i32
  }
  func.func @transform_1(%arg0: i32, %arg1: i32) -> (i32, i32) {
    %c0_i32 = arith.constant 0 : i32
    %c0_i32_0 = arith.constant 0 : i32
    %c0_i32_1 = arith.constant 0 : i32
    return %c0_i32, %c0_i32_0 : i32, i32
  }
  func.func @transform_2(%arg0: i32, %arg1: i32) -> (i32, i32) {
    %c0_i32 = arith.constant 0 : i32
    %c0_i32_0 = arith.constant 0 : i32
    %c0_i32_1 = arith.constant 0 : i32
    return %c0_i32, %c0_i32_0 : i32, i32
  }
  func.func @transform_3(%arg0: i32, %arg1: i32) -> (i32, i32) {
    %c0_i32 = arith.constant 0 : i32
    %c0_i32_0 = arith.constant 0 : i32
    %c0_i32_1 = arith.constant 0 : i32
    return %c0_i32, %c0_i32_0 : i32, i32
  }
  func.func @transform_4(%arg0: i32, %arg1: i32) -> (i32, i32) {
    %c0_i32 = arith.constant 0 : i32
    %c0_i32_0 = arith.constant 0 : i32
    %c0_i32_1 = arith.constant 0 : i32
    return %c0_i32, %c0_i32_0 : i32, i32
  }
  func.func @transform_5(%arg0: i32, %arg1: i32) -> (i32, i32, i32) {
    %c0_i32 = arith.constant 0 : i32
    %c0_i32_0 = arith.constant 0 : i32
    return %arg0, %arg1, %c0_i32 : i32, i32, i32
  }
}

</mosaic_0001>

<llo_original>
// kernel: rnn_forward.2
$region0: #{rnn_forward.2}
  #allocation0 [shape = 'u32[]', space=smem, size = 0x4, offset = 0x4, fixed_abs, tag = 'smem constant byte address 0x4 - core index']
  #allocation1 [shape = 'u32[144,128]{1,0:T(1,128)}', space=vmem, size = 0x12000, scoped, tag = 'internal scratch']
  #allocation2 [shape = 'f32[8,128]{1,0:T(8,128)}', space=vmem, size = 0x1000, scoped, tag = 'scratch operand']
  %s0 = inlined_call_operand.vmem [shape: bf16[1,64,128], index: 0, kind: input, shape index: {}]
  %s1 = inlined_call_operand.vmem [shape: bf16[128,128], index: 1, kind: input, shape index: {}]
  %s2 = inlined_call_operand.vmem [shape: bf16[128,128], index: 2, kind: input, shape index: {}]
  %s3 = inlined_call_operand.vmem [shape: f32[1,128], index: 3, kind: input, shape index: {}]
  %s4 = inlined_call_operand.vmem [shape: f32[1,128], index: 4, kind: input, shape index: {}]
  %s5 = inlined_call_operand.vmem [shape: bf16[1,64,128], index: 5, kind: output, shape index: {}]
  %s6 = sld [smem:[#allocation0]]
  $region34: #{rnn_forward.2} parent=0
    _
  %s8 = ssub.s32 1, %s6
  %s9 = scalar_select 0, %s8, %s6
  // Predicated region
  $region2: #{rnn_forward.2} parent=0 // pred_check
    _
  $region3: #{rnn_forward.2} parent=0 // pred_check_branch
    %11 = sbr.rel (0) target = $region5
  $region4: #{rnn_forward.2} parent=0 // pred_region
    _
  $region5: #{rnn_forward.2} parent=0 // pred_fallthru
    _
  // Predicated region
  $region6: #{rnn_forward.2} parent=0 // pred_check
    _
  $region7: #{rnn_forward.2} parent=0 // pred_check_branch
    %13 = sbr.rel (0) target = $region9
  $region8: #{rnn_forward.2} parent=0 // pred_region
    _
  $region9: #{rnn_forward.2} parent=0 // pred_fallthru
    _
  // Predicated region
  $region10: #{rnn_forward.2} parent=0 // pred_check
    _
  $region11: #{rnn_forward.2} parent=0 // pred_check_branch
    %15 = sbr.rel (0) target = $region13
  $region12: #{rnn_forward.2} parent=0 // pred_region
    _
  $region13: #{rnn_forward.2} parent=0 // pred_fallthru
    _
  // Predicated region
  $region14: #{rnn_forward.2} parent=0 // pred_check
    _
  $region15: #{rnn_forward.2} parent=0 // pred_check_branch
    %17 = sbr.rel (0) target = $region17
  $region16: #{rnn_forward.2} parent=0 // pred_region
    _
  $region17: #{rnn_forward.2} parent=0 // pred_fallthru
    _
  // Predicated region
  $region18: #{rnn_forward.2} parent=0 // pred_check
    _
  $region19: #{rnn_forward.2} parent=0 // pred_check_branch
    %19 = sbr.rel (0) target = $region21
  $region20: #{rnn_forward.2} parent=0 // pred_region
    _
  $region21: #{rnn_forward.2} parent=0 // pred_fallthru
    _
  %p21 = scmp.eq.s32.totalorder 0, 0
  // Predicated region
  $region22: #{rnn_forward.2} parent=0 // pred_check
    %p22 = pneg %p21
  $region23: #{rnn_forward.2} parent=0 // pred_check_branch
    %24 = sbr.rel (%p22) target = $region25
  $region24: #{rnn_forward.2} parent=0 // pred_region
    %v25 = vld [vmem:[%s4] sm:$0x1]
    %v27 = vlaneseq
    %v28 = vshrl.u32 %v27, 7
    %v29 = vsub.s32 0, %v28
    %v30 = vrot.slane %v25, %v29
    %32 = vst [vmem:[#allocation2] sm:$0xff] %v30
  $region25: #{rnn_forward.2} parent=0 // pred_fallthru
    _
  %v33 = vld [vmem:[%s0] sm:$0xf]
  %v34 = vld [vmem:[%s0 + $0x4] sm:$0xf]
  %v35 = vld [vmem:[%s0 + $0x8] sm:$0xf]
  %v36 = vld [vmem:[%s0 + $0xc] sm:$0xf]
  %v37 = vld [vmem:[%s0 + $0x10] sm:$0xf]
  %v38 = vld [vmem:[%s0 + $0x14] sm:$0xf]
  %v39 = vld [vmem:[%s0 + $0x18] sm:$0xf]
  %v40 = vld [vmem:[%s0 + $0x1c] sm:$0xf]
  %v41 = vld [vmem:[%s1] sm:$0xf]
  %v42 = vld [vmem:[%s1 + $0x4] sm:$0xf]
  %v43 = vld [vmem:[%s1 + $0x8] sm:$0xf]
  %v44 = vld [vmem:[%s1 + $0xc] sm:$0xf]
  %v45 = vld [vmem:[%s1 + $0x10] sm:$0xf]
  %v46 = vld [vmem:[%s1 + $0x14] sm:$0xf]
  %v47 = vld [vmem:[%s1 + $0x18] sm:$0xf]
  %v48 = vld [vmem:[%s1 + $0x1c] sm:$0xf]
  %v49 = vld [vmem:[%s1 + $0x20] sm:$0xf]
  %v50 = vld [vmem:[%s1 + $0x24] sm:$0xf]
  %v51 = vld [vmem:[%s1 + $0x28] sm:$0xf]
  %v52 = vld [vmem:[%s1 + $0x2c] sm:$0xf]
  %v53 = vld [vmem:[%s1 + $0x30] sm:$0xf]
  %v54 = vld [vmem:[%s1 + $0x34] sm:$0xf]
  %v55 = vld [vmem:[%s1 + $0x38] sm:$0xf]
  %v56 = vld [vmem:[%s1 + $0x3c] sm:$0xf]
  %v57 = vld [vmem:[%s3] sm:$0x1]
  %v59 = vlaneseq
  %v60 = vshrl.u32 %v59, 7
  %v61 = vsub.s32 0, %v60
  %v62 = vrot.slane %v57, %v61
  %v72 = vunpack.c.l.b16 %v33
  %v73 = vunpack.c.l.b16 %v34
  %v74 = vunpack.c.l.b16 %v35
  %v75 = vunpack.c.l.b16 %v36
  %v76 = vunpack.c.l.b16 %v37
  %v77 = vunpack.c.l.b16 %v38
  %v78 = vunpack.c.l.b16 %v39
  %v79 = vunpack.c.l.b16 %v40
  %v80 = vpack.c.b16 %v73, %v72
  %v81 = vpack.c.b16 %v75, %v74
  %v82 = vpack.c.b16 %v77, %v76
  %v83 = vpack.c.b16 %v79, %v78
  %v104 = vunpack.c.l.b16 %v41
  %v105 = vunpack.c.l.b16 %v42
  %v106 = vunpack.c.l.b16 %v43
  %v107 = vunpack.c.l.b16 %v44
  %v108 = vunpack.c.l.b16 %v45
  %v109 = vunpack.c.l.b16 %v46
  %v110 = vunpack.c.l.b16 %v47
  %v111 = vunpack.c.l.b16 %v48
  %v112 = vunpack.c.l.b16 %v49
  %v113 = vunpack.c.l.b16 %v50
  %v114 = vunpack.c.l.b16 %v51
  %v115 = vunpack.c.l.b16 %v52
  %v116 = vunpack.c.l.b16 %v53
  %v117 = vunpack.c.l.b16 %v54
  %v118 = vunpack.c.l.b16 %v55
  %v119 = vunpack.c.l.b16 %v56
  %v120 = vpack.c.b16 %v105, %v104
  %v121 = vpack.c.b16 %v107, %v106
  %v122 = vpack.c.b16 %v109, %v108
  %v123 = vpack.c.b16 %v111, %v110
  %v124 = vpack.c.b16 %v113, %v112
  %v125 = vpack.c.b16 %v115, %v114
  %v126 = vpack.c.b16 %v117, %v116
  %v127 = vpack.c.b16 %v119, %v118
  %136 = vmatprep.subr.bf16.mxu0 0
  %137 = vmatpush1.bf16.msra.mxu0 %v127
  %138 = vmatprep.subr.bf16.mxu0 0
  %139 = vmatpush1.bf16.msra.mxu0 %v126
  %140 = vmatprep.subr.bf16.mxu0 0
  %141 = vmatpush1.bf16.msra.mxu0 %v125
  %142 = vmatprep.subr.bf16.mxu0 0
  %143 = vmatpush1.bf16.msra.mxu0 %v124
  %144 = vmatprep.subr.bf16.mxu0 0
  %145 = vmatpush1.bf16.msra.mxu0 %v123
  %146 = vmatprep.subr.bf16.mxu0 0
  %147 = vmatpush1.bf16.msra.mxu0 %v122
  %148 = vmatprep.subr.bf16.mxu0 0
  %149 = vmatpush1.bf16.msra.mxu0 %v121
  %150 = vmatprep.subr.bf16.mxu0 0
  %151 = vmatpush1.bf16.msra.mxu0 %v120
  %152 = vmatprep.subr.bf16.mxu0 0
  %153 = vmatpush2.bf16.msra.mxu0 0
  %154 = vmatprep.subr.bf16.mxu0 0
  %155 = vmatpush2.bf16.msra.mxu0 0
  %156 = vmatprep.subr.bf16.mxu0 0
  %157 = vmatpush2.bf16.msra.mxu0 0
  %158 = vmatprep.subr.bf16.mxu0 0
  %159 = vmatpush2.bf16.msra.mxu0 0
  %160 = vmatprep.subr.bf16.mxu0 0
  %161 = vmatpush2.bf16.msra.mxu0 0
  %162 = vmatprep.subr.bf16.mxu0 0
  %163 = vmatpush2.bf16.msra.mxu0 0
  %164 = vmatprep.subr.bf16.mxu0 0
  %165 = vmatpush2.bf16.msra.mxu0 0
  %166 = vmatprep.subr.bf16.mxu0 0
  %167 = vmatpush2.bf16.msra.mxu0 0
  %168 = vmatprep.mubr.bf16.mxu0 0
  %169 = vmatmul.mubr.bf16.gmra.mxu0 %v80
  %v170 = vpop.f32.mrf.mxu0
  %v171 = vadd.f32 %v62, %v170
  %v172 = vpop.f32.mrf.mxu0
  %v173 = vpop.f32.mrf.mxu0
  %v174 = vadd.f32 %v62, %v173
  %v175 = vpop.f32.mrf.mxu0
  %176 = vmatprep.mubr.bf16.mxu0 0
  %177 = vmatmul.mubr.bf16.gmra.mxu0 %v81
  %v178 = vpop.f32.mrf.mxu0
  %v179 = vadd.f32 %v62, %v178
  %v180 = vpop.f32.mrf.mxu0
  %v181 = vpop.f32.mrf.mxu0
  %v182 = vadd.f32 %v62, %v181
  %v183 = vpop.f32.mrf.mxu0
  %184 = vmatprep.mubr.bf16.mxu0 0
  %185 = vmatmul.mubr.bf16.gmra.mxu0 %v82
  %v186 = vpop.f32.mrf.mxu0
  %v187 = vadd.f32 %v62, %v186
  %v188 = vpop.f32.mrf.mxu0
  %v189 = vpop.f32.mrf.mxu0
  %v190 = vadd.f32 %v62, %v189
  %v191 = vpop.f32.mrf.mxu0
  %192 = vmatprep.mubr.bf16.mxu0 0
  %193 = vmatmul.mubr.bf16.gmra.mxu0 %v83
  %v194 = vpop.f32.mrf.mxu0
  %v195 = vadd.f32 %v62, %v194
  %v196 = vpop.f32.mrf.mxu0
  %v197 = vpop.f32.mrf.mxu0
  %v198 = vadd.f32 %v62, %v197
  %v199 = vpop.f32.mrf.mxu0
  %200 = vdwg.mxu0
  %v201 = vld [vmem:[%s2] sm:$0xf]
  %v202 = vld [vmem:[%s2 + $0x4] sm:$0xf]
  %v203 = vld [vmem:[%s2 + $0x8] sm:$0xf]
  %v204 = vld [vmem:[%s2 + $0xc] sm:$0xf]
  %v205 = vld [vmem:[%s2 + $0x10] sm:$0xf]
  %v206 = vld [vmem:[%s2 + $0x14] sm:$0xf]
  %v207 = vld [vmem:[%s2 + $0x18] sm:$0xf]
  %v208 = vld [vmem:[%s2 + $0x1c] sm:$0xf]
  %v209 = vld [vmem:[%s2 + $0x20] sm:$0xf]
  %v210 = vld [vmem:[%s2 + $0x24] sm:$0xf]
  %v211 = vld [vmem:[%s2 + $0x28] sm:$0xf]
  %v212 = vld [vmem:[%s2 + $0x2c] sm:$0xf]
  %v213 = vld [vmem:[%s2 + $0x30] sm:$0xf]
  %v214 = vld [vmem:[%s2 + $0x34] sm:$0xf]
  %v215 = vld [vmem:[%s2 + $0x38] sm:$0xf]
  %v216 = vld [vmem:[%s2 + $0x3c] sm:$0xf]
  %v217 = vld [vmem:[#allocation2] sm:$0xff]
  %v218 = vpack.c.bf16 %v217, %v217
  %v235 = vunpack.c.l.b16 %v201
  %v236 = vunpack.c.l.b16 %v202
  %v237 = vunpack.c.l.b16 %v203
  %v238 = vunpack.c.l.b16 %v204
  %v239 = vunpack.c.l.b16 %v205
  %v240 = vunpack.c.l.b16 %v206
  %v241 = vunpack.c.l.b16 %v207
  %v242 = vunpack.c.l.b16 %v208
  %v243 = vunpack.c.l.b16 %v209
  %v244 = vunpack.c.l.b16 %v210
  %v245 = vunpack.c.l.b16 %v211
  %v246 = vunpack.c.l.b16 %v212
  %v247 = vunpack.c.l.b16 %v213
  %v248 = vunpack.c.l.b16 %v214
  %v249 = vunpack.c.l.b16 %v215
  %v250 = vunpack.c.l.b16 %v216
  %v251 = vpack.c.b16 %v236, %v235
  %v252 = vpack.c.b16 %v238, %v237
  %v253 = vpack.c.b16 %v240, %v239
  %v254 = vpack.c.b16 %v242, %v241
  %v255 = vpack.c.b16 %v244, %v243
  %v256 = vpack.c.b16 %v246, %v245
  %v257 = vpack.c.b16 %v248, %v247
  %v258 = vpack.c.b16 %v250, %v249
  %267 = vmatprep.subr.bf16.mxu0 0
  %268 = vmatpush1.bf16.msra.mxu0 %v258
  %269 = vmatprep.subr.bf16.mxu0 0
  %270 = vmatpush1.bf16.msra.mxu0 %v257
  %271 = vmatprep.subr.bf16.mxu0 0
  %272 = vmatpush1.bf16.msra.mxu0 %v256
  %273 = vmatprep.subr.bf16.mxu0 0
  %274 = vmatpush1.bf16.msra.mxu0 %v255
  %275 = vmatprep.subr.bf16.mxu0 0
  %276 = vmatpush1.bf16.msra.mxu0 %v254
  %277 = vmatprep.subr.bf16.mxu0 0
  %278 = vmatpush1.bf16.msra.mxu0 %v253
  %279 = vmatprep.subr.bf16.mxu0 0
  %280 = vmatpush1.bf16.msra.mxu0 %v252
  %281 = vmatprep.subr.bf16.mxu0 0
  %282 = vmatpush1.bf16.msra.mxu0 %v251
  %283 = vmatprep.subr.bf16.mxu0 0
  %284 = vmatpush2.bf16.msra.mxu0 0
  %285 = vmatprep.subr.bf16.mxu0 0
  %286 = vmatpush2.bf16.msra.mxu0 0
  %287 = vmatprep.subr.bf16.mxu0 0
  %288 = vmatpush2.bf16.msra.mxu0 0
  %289 = vmatprep.subr.bf16.mxu0 0
  %290 = vmatpush2.bf16.msra.mxu0 0
  %291 = vmatprep.subr.bf16.mxu0 0
  %292 = vmatpush2.bf16.msra.mxu0 0
  %293 = vmatprep.subr.bf16.mxu0 0
  %294 = vmatpush2.bf16.msra.mxu0 0
  %295 = vmatprep.subr.bf16.mxu0 0
  %296 = vmatpush2.bf16.msra.mxu0 0
  %297 = vmatprep.subr.bf16.mxu0 0
  %298 = vmatpush2.bf16.msra.mxu0 0
  %299 = vmatprep.mubr.bf16.mxu0 0
  %300 = vmatmul.mubr.bf16.gmra.mxu0 %v218
  %v301 = vpop.f32.mrf.mxu0
  %v302 = vadd.f32 0.0, %v301
  %v303 = vpop.f32.mrf.mxu0
  %v304 = vpop.f32.mrf.mxu0
  %v305 = vpop.f32.mrf.mxu0
  %306 = vdwg.mxu0
  %v307 = vadd.f32 %v171, %v302
  %v308 = vtanh.pop %v307
  %v309 = vpack.c.bf16 %v308, %v308
  %310 = vst [vmem:[%s5] sm:$0xf] %v309
  %311 = vmatprep.subr.bf16.mxu0 0
  %312 = vmatpush1.bf16.msra.mxu0 %v258
  %313 = vmatprep.subr.bf16.mxu0 0
  %314 = vmatpush1.bf16.msra.mxu0 %v257
  %315 = vmatprep.subr.bf16.mxu0 0
  %316 = vmatpush1.bf16.msra.mxu0 %v256
  %317 = vmatprep.subr.bf16.mxu0 0
  %318 = vmatpush1.bf16.msra.mxu0 %v255
  %319 = vmatprep.subr.bf16.mxu0 0
  %320 = vmatpush1.bf16.msra.mxu0 %v254
  %321 = vmatprep.subr.bf16.mxu0 0
  %322 = vmatpush1.bf16.msra.mxu0 %v253
  %323 = vmatprep.subr.bf16.mxu0 0
  %324 = vmatpush1.bf16.msra.mxu0 %v252
  %325 = vmatprep.subr.bf16.mxu0 0
  %326 = vmatpush1.bf16.msra.mxu0 %v251
  %327 = vmatprep.subr.bf16.mxu0 0
  %328 = vmatpush2.bf16.msra.mxu0 0
  %329 = vmatprep.subr.bf16.mxu0 0
  %330 = vmatpush2.bf16.msra.mxu0 0
  %331 = vmatprep.subr.bf16.mxu0 0
  %332 = vmatpush2.bf16.msra.mxu0 0
  %333 = vmatprep.subr.bf16.mxu0 0
  %334 = vmatpush2.bf16.msra.mxu0 0
  %335 = vmatprep.subr.bf16.mxu0 0
  %336 = vmatpush2.bf16.msra.mxu0 0
  %337 = vmatprep.subr.bf16.mxu0 0
  %338 = vmatpush2.bf16.msra.mxu0 0
  %339 = vmatprep.subr.bf16.mxu0 0
  %340 = vmatpush2.bf16.msra.mxu0 0
  %341 = vmatprep.subr.bf16.mxu0 0
  %342 = vmatpush2.bf16.msra.mxu0 0
  %343 = vmatprep.mubr.bf16.mxu0 0
  %344 = vmatmul.mubr.bf16.gmra.mxu0 %v309
  %v345 = vpop.f32.mrf.mxu0
  %v346 = vadd.f32 0.0, %v345
  %v347 = vpop.f32.mrf.mxu0
  %v348 = vpop.f32.mrf.mxu0
  %v349 = vpop.f32.mrf.mxu0
  %350 = vdwg.mxu0
  %v351 = vadd.f32 %v174, %v346
  %v352 = vtanh.pop %v351
  %v353 = vpack.c.bf16 %v352, %v352
  %354 = vst [vmem:[%s5 + $0x4] sm:$0xf] %v353
  %355 = vmatprep.subr.bf16.mxu0 0
  %356 = vmatpush1.bf16.msra.mxu0 %v258
  %357 = vmatprep.subr.bf16.mxu0 0
  %358 = vmatpush1.bf16.msra.mxu0 %v257
  %359 = vmatprep.subr.bf16.mxu0 0
  %360 = vmatpush1.bf16.msra.mxu0 %v256
  %361 = vmatprep.subr.bf16.mxu0 0
  %362 = vmatpush1.bf16.msra.mxu0 %v255
  %363 = vmatprep.subr.bf16.mxu0 0
  %364 = vmatpush1.bf16.msra.mxu0 %v254
  %365 = vmatprep.subr.bf16.mxu0 0
  %366 = vmatpush1.bf16.msra.mxu0 %v253
  %367 = vmatprep.subr.bf16.mxu0 0
  %368 = vmatpush1.bf16.msra.mxu0 %v252
  %369 = vmatprep.subr.bf16.mxu0 0
  %370 = vmatpush1.bf16.msra.mxu0 %v251
  %371 = vmatprep.subr.bf16.mxu0 0
  %372 = vmatpush2.bf16.msra.mxu0 0
  %373 = vmatprep.subr.bf16.mxu0 0
  %374 = vmatpush2.bf16.msra.mxu0 0
  %375 = vmatprep.subr.bf16.mxu0 0
  %376 = vmatpush2.bf16.msra.mxu0 0
  %377 = vmatprep.subr.bf16.mxu0 0
  %378 = vmatpush2.bf16.msra.mxu0 0
  %379 = vmatprep.subr.bf16.mxu0 0
  %380 = vmatpush2.bf16.msra.mxu0 0
  %381 = vmatprep.subr.bf16.mxu0 0
  %382 = vmatpush2.bf16.msra.mxu0 0
  %383 = vmatprep.subr.bf16.mxu0 0
  %384 = vmatpush2.bf16.msra.mxu0 0
  %385 = vmatprep.subr.bf16.mxu0 0
  %386 = vmatpush2.bf16.msra.mxu0 0
  %387 = vmatprep.mubr.bf16.mxu0 0
  %388 = vmatmul.mubr.bf16.gmra.mxu0 %v353
  %v389 = vpop.f32.mrf.mxu0
  %v390 = vadd.f32 0.0, %v389
  %v391 = vpop.f32.mrf.mxu0
  %v392 = vpop.f32.mrf.mxu0
  %v393 = vpop.f32.mrf.mxu0
  %394 = vdwg.mxu0
  %v395 = vadd.f32 %v179, %v390
  %v396 = vtanh.pop %v395
  %v397 = vpack.c.bf16 %v396, %v396
  %398 = vst [vmem:[%s5 + $0x8] sm:$0xf] %v397
  %399 = vmatprep.subr.bf16.mxu0 0
  %400 = vmatpush1.bf16.msra.mxu0 %v258
  %401 = vmatprep.subr.bf16.mxu0 0
  %402 = vmatpush1.bf16.msra.mxu0 %v257
  %403 = vmatprep.subr.bf16.mxu0 0
  %404 = vmatpush1.bf16.msra.mxu0 %v256
  %405 = vmatprep.subr.bf16.mxu0 0
  %406 = vmatpush1.bf16.msra.mxu0 %v255
  %407 = vmatprep.subr.bf16.mxu0 0
  %408 = vmatpush1.bf16.msra.mxu0 %v254
  %409 = vmatprep.subr.bf16.mxu0 0
  %410 = vmatpush1.bf16.msra.mxu0 %v253
  %411 = vmatprep.subr.bf16.mxu0 0
  %412 = vmatpush1.bf16.msra.mxu0 %v252
  %413 = vmatprep.subr.bf16.mxu0 0
  %414 = vmatpush1.bf16.msra.mxu0 %v251
  %415 = vmatprep.subr.bf16.mxu0 0
  %416 = vmatpush2.bf16.msra.mxu0 0
  %417 = vmatprep.subr.bf16.mxu0 0
  %418 = vmatpush2.bf16.msra.mxu0 0
  %419 = vmatprep.subr.bf16.mxu0 0
  %420 = vmatpush2.bf16.msra.mxu0 0
  %421 = vmatprep.subr.bf16.mxu0 0
  %422 = vmatpush2.bf16.msra.mxu0 0
  %423 = vmatprep.subr.bf16.mxu0 0
  %424 = vmatpush2.bf16.msra.mxu0 0
  %425 = vmatprep.subr.bf16.mxu0 0
  %426 = vmatpush2.bf16.msra.mxu0 0
  %427 = vmatprep.subr.bf16.mxu0 0
  %428 = vmatpush2.bf16.msra.mxu0 0
  %429 = vmatprep.subr.bf16.mxu0 0
  %430 = vmatpush2.bf16.msra.mxu0 0
  %431 = vmatprep.mubr.bf16.mxu0 0
  %432 = vmatmul.mubr.bf16.gmra.mxu0 %v397
  %v433 = vpop.f32.mrf.mxu0
  %v434 = vadd.f32 0.0, %v433
  %v435 = vpop.f32.mrf.mxu0
  %v436 = vpop.f32.mrf.mxu0
  %v437 = vpop.f32.mrf.mxu0
  %438 = vdwg.mxu0
  %v439 = vadd.f32 %v182, %v434
  %v440 = vtanh.pop %v439
  %v441 = vpack.c.bf16 %v440, %v440
  %442 = vst [vmem:[%s5 + $0xc] sm:$0xf] %v441
  %443 = vmatprep.subr.bf16.mxu0 0
  %444 = vmatpush1.bf16.msra.mxu0 %v258
  %445 = vmatprep.subr.bf16.mxu0 0
  %446 = vmatpush1.bf16.msra.mxu0 %v257
  %447 = vmatprep.subr.bf16.mxu0 0
  %448 = vmatpush1.bf16.msra.mxu0 %v256
  %449 = vmatprep.subr.bf16.mxu0 0
  %450 = vmatpush1.bf16.msra.mxu0 %v255
  %451 = vmatprep.subr.bf16.mxu0 0
  %452 = vmatpush1.bf16.msra.mxu0 %v254
  %453 = vmatprep.subr.bf16.mxu0 0
  %454 = vmatpush1.bf16.msra.mxu0 %v253
  %455 = vmatprep.subr.bf16.mxu0 0
  %456 = vmatpush1.bf16.msra.mxu0 %v252
  %457 = vmatprep.subr.bf16.mxu0 0
  %458 = vmatpush1.bf16.msra.mxu0 %v251
  %459 = vmatprep.subr.bf16.mxu0 0
  %460 = vmatpush2.bf16.msra.mxu0 0
  %461 = vmatprep.subr.bf16.mxu0 0
  %462 = vmatpush2.bf16.msra.mxu0 0
  %463 = vmatprep.subr.bf16.mxu0 0
  %464 = vmatpush2.bf16.msra.mxu0 0
  %465 = vmatprep.subr.bf16.mxu0 0
  %466 = vmatpush2.bf16.msra.mxu0 0
  %467 = vmatprep.subr.bf16.mxu0 0
  %468 = vmatpush2.bf16.msra.mxu0 0
  %469 = vmatprep.subr.bf16.mxu0 0
  %470 = vmatpush2.bf16.msra.mxu0 0
  %471 = vmatprep.subr.bf16.mxu0 0
  %472 = vmatpush2.bf16.msra.mxu0 0
  %473 = vmatprep.subr.bf16.mxu0 0
  %474 = vmatpush2.bf16.msra.mxu0 0
  %475 = vmatprep.mubr.bf16.mxu0 0
  %476 = vmatmul.mubr.bf16.gmra.mxu0 %v441
  %v477 = vpop.f32.mrf.mxu0
  %v478 = vadd.f32 0.0, %v477
  %v479 = vpop.f32.mrf.mxu0
  %v480 = vpop.f32.mrf.mxu0
  %v481 = vpop.f32.mrf.mxu0
  %482 = vdwg.mxu0
  %v483 = vadd.f32 %v187, %v478
  %v484 = vtanh.pop %v483
  %v485 = vpack.c.bf16 %v484, %v484
  %486 = vst [vmem:[%s5 + $0x10] sm:$0xf] %v485
  %487 = vmatprep.subr.bf16.mxu0 0
  %488 = vmatpush1.bf16.msra.mxu0 %v258
  %489 = vmatprep.subr.bf16.mxu0 0
  %490 = vmatpush1.bf16.msra.mxu0 %v257
  %491 = vmatprep.subr.bf16.mxu0 0
  %492 = vmatpush1.bf16.msra.mxu0 %v256
  %493 = vmatprep.subr.bf16.mxu0 0
  %494 = vmatpush1.bf16.msra.mxu0 %v255
  %495 = vmatprep.subr.bf16.mxu0 0
  %496 = vmatpush1.bf16.msra.mxu0 %v254
  %497 = vmatprep.subr.bf16.mxu0 0
  %498 = vmatpush1.bf16.msra.mxu0 %v253
  %499 = vmatprep.subr.bf16.mxu0 0
  %500 = vmatpush1.bf16.msra.mxu0 %v252
  %501 = vmatprep.subr.bf16.mxu0 0
  %502 = vmatpush1.bf16.msra.mxu0 %v251
  %503 = vmatprep.subr.bf16.mxu0 0
  %504 = vmatpush2.bf16.msra.mxu0 0
  %505 = vmatprep.subr.bf16.mxu0 0
  %506 = vmatpush2.bf16.msra.mxu0 0
  %507 = vmatprep.subr.bf16.mxu0 0
  %508 = vmatpush2.bf16.msra.mxu0 0
  %509 = vmatprep.subr.bf16.mxu0 0
  %510 = vmatpush2.bf16.msra.mxu0 0
  %511 = vmatprep.subr.bf16.mxu0 0
  %512 = vmatpush2.bf16.msra.mxu0 0
  %513 = vmatprep.subr.bf16.mxu0 0
  %514 = vmatpush2.bf16.msra.mxu0 0
  %515 = vmatprep.subr.bf16.mxu0 0
  %516 = vmatpush2.bf16.msra.mxu0 0
  %517 = vmatprep.subr.bf16.mxu0 0
  %518 = vmatpush2.bf16.msra.mxu0 0
  %519 = vmatprep.mubr.bf16.mxu0 0
  %520 = vmatmul.mubr.bf16.gmra.mxu0 %v485
  %v521 = vpop.f32.mrf.mxu0
  %v522 = vadd.f32 0.0, %v521
  %v523 = vpop.f32.mrf.mxu0
  %v524 = vpop.f32.mrf.mxu0
  %v525 = vpop.f32.mrf.mxu0
  %526 = vdwg.mxu0
  %v527 = vadd.f32 %v190, %v522
  %v528 = vtanh.pop %v527
  %v529 = vpack.c.bf16 %v528, %v528
  %530 = vst [vmem:[%s5 + $0x14] sm:$0xf] %v529
  %531 = vmatprep.subr.bf16.mxu0 0
  %532 = vmatpush1.bf16.msra.mxu0 %v258
  %533 = vmatprep.subr.bf16.mxu0 0
  %534 = vmatpush1.bf16.msra.mxu0 %v257
  %535 = vmatprep.subr.bf16.mxu0 0
  %536 = vmatpush1.bf16.msra.mxu0 %v256
  %537 = vmatprep.subr.bf16.mxu0 0
  %538 = vmatpush1.bf16.msra.mxu0 %v255
  %539 = vmatprep.subr.bf16.mxu0 0
  %540 = vmatpush1.bf16.msra.mxu0 %v254
  %541 = vmatprep.subr.bf16.mxu0 0
  %542 = vmatpush1.bf16.msra.mxu0 %v253
  %543 = vmatprep.subr.bf16.mxu0 0
  %544 = vmatpush1.bf16.msra.mxu0 %v252
  %545 = vmatprep.subr.bf16.mxu0 0
  %546 = vmatpush1.bf16.msra.mxu0 %v251
  %547 = vmatprep.subr.bf16.mxu0 0
  %548 = vmatpush2.bf16.msra.mxu0 0
  %549 = vmatprep.subr.bf16.mxu0 0
  %550 = vmatpush2.bf16.msra.mxu0 0
  %551 = vmatprep.subr.bf16.mxu0 0
  %552 = vmatpush2.bf16.msra.mxu0 0
  %553 = vmatprep.subr.bf16.mxu0 0
  %554 = vmatpush2.bf16.msra.mxu0 0
  %555 = vmatprep.subr.bf16.mxu0 0
  %556 = vmatpush2.bf16.msra.mxu0 0
  %557 = vmatprep.subr.bf16.mxu0 0
  %558 = vmatpush2.bf16.msra.mxu0 0
  %559 = vmatprep.subr.bf16.mxu0 0
  %560 = vmatpush2.bf16.msra.mxu0 0
  %561 = vmatprep.subr.bf16.mxu0 0
  %562 = vmatpush2.bf16.msra.mxu0 0
  %563 = vmatprep.mubr.bf16.mxu0 0
  %564 = vmatmul.mubr.bf16.gmra.mxu0 %v529
  %v565 = vpop.f32.mrf.mxu0
  %v566 = vadd.f32 0.0, %v565
  %v567 = vpop.f32.mrf.mxu0
  %v568 = vpop.f32.mrf.mxu0
  %v569 = vpop.f32.mrf.mxu0
  %570 = vdwg.mxu0
  %v571 = vadd.f32 %v195, %v566
  %v572 = vtanh.pop %v571
  %v573 = vpack.c.bf16 %v572, %v572
  %574 = vst [vmem:[%s5 + $0x18] sm:$0xf] %v573
  %575 = vmatprep.subr.bf16.mxu0 0
  %576 = vmatpush1.bf16.msra.mxu0 %v258
  %577 = vmatprep.subr.bf16.mxu0 0
  %578 = vmatpush1.bf16.msra.mxu0 %v257
  %579 = vmatprep.subr.bf16.mxu0 0
  %580 = vmatpush1.bf16.msra.mxu0 %v256
  %581 = vmatprep.subr.bf16.mxu0 0
  %582 = vmatpush1.bf16.msra.mxu0 %v255
  %583 = vmatprep.subr.bf16.mxu0 0
  %584 = vmatpush1.bf16.msra.mxu0 %v254
  %585 = vmatprep.subr.bf16.mxu0 0
  %586 = vmatpush1.bf16.msra.mxu0 %v253
  %587 = vmatprep.subr.bf16.mxu0 0
  %588 = vmatpush1.bf16.msra.mxu0 %v252
  %589 = vmatprep.subr.bf16.mxu0 0
  %590 = vmatpush1.bf16.msra.mxu0 %v251
  %591 = vmatprep.subr.bf16.mxu0 0
  %592 = vmatpush2.bf16.msra.mxu0 0
  %593 = vmatprep.subr.bf16.mxu0 0
  %594 = vmatpush2.bf16.msra.mxu0 0
  %595 = vmatprep.subr.bf16.mxu0 0
  %596 = vmatpush2.bf16.msra.mxu0 0
  %597 = vmatprep.subr.bf16.mxu0 0
  %598 = vmatpush2.bf16.msra.mxu0 0
  %599 = vmatprep.subr.bf16.mxu0 0
  %600 = vmatpush2.bf16.msra.mxu0 0
  %601 = vmatprep.subr.bf16.mxu0 0
  %602 = vmatpush2.bf16.msra.mxu0 0
  %603 = vmatprep.subr.bf16.mxu0 0
  %604 = vmatpush2.bf16.msra.mxu0 0
  %605 = vmatprep.subr.bf16.mxu0 0
  %606 = vmatpush2.bf16.msra.mxu0 0
  %607 = vmatprep.mubr.bf16.mxu0 0
  %608 = vmatmul.mubr.bf16.gmra.mxu0 %v573
  %v609 = vpop.f32.mrf.mxu0
  %v610 = vadd.f32 0.0, %v609
  %v611 = vpop.f32.mrf.mxu0
  %v612 = vpop.f32.mrf.mxu0
  %v613 = vpop.f32.mrf.mxu0
  %614 = vdwg.mxu0
  %v615 = vadd.f32 %v198, %v610
  %v616 = vtanh.pop %v615
  %v617 = vpack.c.bf16 %v616, %v616
  %618 = vst [vmem:[%s5 + $0x1c] sm:$0xf] %v617
  %619 = vst [vmem:[#allocation2] sm:$0xff] %v616
  // Predicated region
  $region26: #{rnn_forward.2} parent=0 // pred_check
    _
  $region27: #{rnn_forward.2} parent=0 // pred_check_branch
    %621 = sbr.rel (0) target = $region29
  $region28: #{rnn_forward.2} parent=0 // pred_region
    _
  $region29: #{rnn_forward.2} parent=0 // pred_fallthru
    _
  // Predicated region
  $region30: #{rnn_forward.2} parent=0 // pred_check
    _
  $region31: #{rnn_forward.2} parent=0 // pred_check_branch
    %623 = sbr.rel (0) target = $region33
  $region32: #{rnn_forward.2} parent=0 // pred_region
    _
  $region33: #{rnn_forward.2} parent=0 // pred_fallthru
    _

</llo_original>
